<compile_context>
chip_gen: v5e
topology: v5e:2x2
jax: 0.10.0
libtpu: 0.0.40
codegen_flags: <defaults>
</compile_context>

<pallas_src>
import jax
import jax.numpy as jnp
from jax.experimental import pallas as pl


def matmul_bias_kernel(w_ref, p_ref, b_ref, out_ref):
    """out = w @ patches + bias  --  one MXU matmul + broadcast add.

    w_ref:   (O_pad, K_pad)     flattened, zero-padded weights
    p_ref:   (K_pad, COLS_pad)  zero-padded im2col patches (lane-dense)
    b_ref:   (O_pad, 1)         zero-padded bias
    out_ref: (O_pad, COLS_pad)  lane-dense output
    """
    acc = jnp.dot(w_ref[...], p_ref[...], preferred_element_type=jnp.float32)
    out_ref[...] = (acc + b_ref[...]).astype(out_ref.dtype)


def _round_up(x, m):
    return (x + m - 1) // m * m


def net_forward(x_nchw, weight_oihw, bias):
    """Forward of Net: returns (sim_x, real_x), both NCHW (identical values)."""
    N, C, H, W = x_nchw.shape
    O, _, KH, KW = weight_oihw.shape
    OH, OW = H - KH + 1, W - KW + 1
    cols = N * OH * OW
    k_dim = KH * KW * C

    # Hardware-friendly padded sizes (all padding is zeros).
    o_pad = _round_up(O, 8)          # 5   -> 8    (full sublane tile)
    k_pad = _round_up(k_dim, 8)      # 125 -> 128  (one MXU pass even on v5e)
    cols_pad = _round_up(cols, 128)  # 288 -> 384  (full lane tiles)

    # ---- im2col in the wrapper (layout plumbing is free in XLA) ------------
    x_cnhw = jnp.transpose(x_nchw, (1, 0, 2, 3))               # (C, N, H, W)
    taps = [x_cnhw[:, :, kh:kh + OH, kw:kw + OW]               # (C, N, OH, OW)
            for kh in range(KH) for kw in range(KW)]
    # Row order (kh, kw, c); column order (n, oh, ow).
    patches = jnp.stack(taps, axis=0).reshape(k_dim, cols)
    patches = jnp.pad(patches, ((0, k_pad - k_dim), (0, cols_pad - cols)))

    # Flatten weights to match the (kh, kw, c) row order; zero-pad O and K.
    w_flat = jnp.transpose(weight_oihw, (0, 2, 3, 1)).reshape(O, k_dim)
    w_flat = jnp.pad(w_flat, ((0, o_pad - O), (0, k_pad - k_dim)))
    b_col = jnp.pad(bias.reshape(O, 1), ((0, o_pad - O), (0, 0)))

    cost = pl.CostEstimate(
        flops=2 * o_pad * k_pad * cols_pad,
        transcendentals=0,
        bytes_accessed=4 * (o_pad * k_pad + k_pad * cols_pad
                            + o_pad + o_pad * cols_pad))

    # Gridless single-step pallas_call: whole (tiny, fully tile-aligned)
    # operands live in VMEM; kernel is one matmul + bias add.
    out = pl.pallas_call(
        matmul_bias_kernel,
        out_shape=jax.ShapeDtypeStruct((o_pad, cols_pad), x_nchw.dtype),
        cost_estimate=cost,
    )(w_flat, patches, b_col)

    # Slice off padding, then (O, N*OH*OW) -> (N, O, OH, OW) on the tiny result.
    out_nchw = jnp.transpose(out[:O, :cols].reshape(O, N, OH, OW),
                             (1, 0, 2, 3))
    # Both Net outputs are the same conv; return it twice.
    return out_nchw, out_nchw


def init_params(key, out_ch=5, in_ch=5, k=5):
    """Deterministic Conv2d-style init (uniform in +/- 1/sqrt(fan_in))."""
    kw_key, kb_key = jax.random.split(key)
    fan_in = in_ch * k * k
    bound = 1.0 / jnp.sqrt(fan_in)
    weight = jax.random.uniform(kw_key, (out_ch, in_ch, k, k),
                                minval=-bound, maxval=bound,
                                dtype=jnp.float32)
    bias = jax.random.uniform(kb_key, (out_ch,),
                              minval=-bound, maxval=bound,
                              dtype=jnp.float32)
    return weight, bias


if __name__ == "__main__":
    key = jax.random.PRNGKey(0)
    k_x, k_p = jax.random.split(key)

    # Net expects 5 input channels; kernel 5x5, valid padding, stride 1.
    N, C, H, W = 2, 5, 16, 16
    x = jax.random.normal(k_x, (N, C, H, W), dtype=jnp.float32)
    weight, bias = init_params(k_p)

    sim_x, real_x = jax.jit(net_forward)(x, weight, bias)
    jax.block_until_ready((sim_x, real_x))

    # Reference check with XLA's conv (NCHW / OIHW).
    ref = jax.lax.conv_general_dilated(
        x, weight, window_strides=(1, 1), padding="VALID",
        dimension_numbers=("NCHW", "OIHW", "NCHW"))
    ref = ref + bias.reshape(1, -1, 1, 1)
    assert sim_x.shape == (N, 5, H - 4, W - 4)
    assert real_x.shape == (N, 5, H - 4, W - 4)
    assert jnp.allclose(sim_x, ref, atol=1e-4, rtol=1e-4)
    assert jnp.allclose(real_x, ref, atol=1e-4, rtol=1e-4)

    print("KERNEL_OK")
</pallas_src>

<mosaic_0001>
module attributes {stable_mosaic.version = 11 : i64} {
  func.func @matmul_bias_kernel(%arg0: memref<8x128xf32, #tpu.memory_space<vmem>>, %arg1: memref<128x384xf32, #tpu.memory_space<vmem>>, %arg2: memref<8x1xf32, #tpu.memory_space<vmem>>, %arg3: memref<8x384xf32, #tpu.memory_space<vmem>>) attributes {dimension_semantics = [], scalar_prefetch = 0 : i64, scratch_operands = 0 : i64, tpu.core_type = #tpu.core_type<tc>} {
    %c0 = arith.constant 0 : index
    %c0_0 = arith.constant 0 : index
    %0 = vector.load %arg0[%c0, %c0_0] : memref<8x128xf32, #tpu.memory_space<vmem>>, vector<8x128xf32>
    %c0_1 = arith.constant 0 : index
    %c0_2 = arith.constant 0 : index
    %1 = vector.load %arg1[%c0_1, %c0_2] : memref<128x384xf32, #tpu.memory_space<vmem>>, vector<128x384xf32>
    %cst = arith.constant dense<0.000000e+00> : vector<8x384xf32>
    %2 = tpu.matmul %0, %1, %cst {dimension_numbers = #tpu.dot_dimension_numbers<[1], [0], [0], [1], [0, 0, 1, 1], [], []>} : vector<8x128xf32>, vector<128x384xf32>, vector<8x384xf32> -> vector<8x384xf32>
    %c0_3 = arith.constant 0 : index
    %c0_4 = arith.constant 0 : index
    %3 = vector.load %arg2[%c0_3, %c0_4] : memref<8x1xf32, #tpu.memory_space<vmem>>, vector<8x1xf32>
    %4 = vector.broadcast %3 : vector<8x1xf32> to vector<8x384xf32>
    %5 = arith.addf %2, %4 : vector<8x384xf32>
    %c0_5 = arith.constant 0 : index
    %c0_6 = arith.constant 0 : index
    %6 = vector.load %arg3[%c0_5, %c0_6] : memref<8x384xf32, #tpu.memory_space<vmem>>, vector<8x384xf32>
    tpu.vector_store %arg3[%c0_5, %c0_6], %5 {strides = array<i32>} : memref<8x384xf32, #tpu.memory_space<vmem>>, vector<8x384xf32>,
    return
  }
}

</mosaic_0001>

<llo_original>
// kernel: net_forward.1
$region0: #{net_forward.1}
  #allocation0 [shape = 'u32[]', space=smem, size = 0x4, offset = 0x4, fixed_abs, tag = 'smem constant byte address 0x4 - core index']
  #allocation1 [shape = 'u32[72,128]{1,0:T(1,128)}', space=vmem, size = 0x9000, scoped, tag = 'internal scratch']
  %s0 = inlined_call_operand.vmem [shape: f32[8,128], index: 0, kind: input, shape index: {}]
  %s1 = inlined_call_operand.vmem [shape: f32[128,384], index: 1, kind: input, shape index: {}]
  %s2 = inlined_call_operand.vmem [shape: f32[8,1], index: 2, kind: input, shape index: {}]
  %s3 = inlined_call_operand.vmem [shape: f32[8,384], index: 3, kind: output, shape index: {}]
  %s4 = sld [smem:[#allocation0]]
  $region22: #{net_forward.1} parent=0
    _
  %s6 = ssub.s32 1, %s4
  %s7 = scalar_select 0, %s6, %s4
  // Predicated region
  $region2: #{net_forward.1} parent=0 // pred_check
    _
  $region3: #{net_forward.1} parent=0 // pred_check_branch
    %9 = sbr.rel (0) target = $region5
  $region4: #{net_forward.1} parent=0 // pred_region
    _
  $region5: #{net_forward.1} parent=0 // pred_fallthru
    _
  // Predicated region
  $region6: #{net_forward.1} parent=0 // pred_check
    _
  $region7: #{net_forward.1} parent=0 // pred_check_branch
    %11 = sbr.rel (0) target = $region9
  $region8: #{net_forward.1} parent=0 // pred_region
    _
  $region9: #{net_forward.1} parent=0 // pred_fallthru
    _
  // Predicated region
  $region10: #{net_forward.1} parent=0 // pred_check
    _
  $region11: #{net_forward.1} parent=0 // pred_check_branch
    %13 = sbr.rel (0) target = $region13
  $region12: #{net_forward.1} parent=0 // pred_region
    _
  $region13: #{net_forward.1} parent=0 // pred_fallthru
    _
  %v14 = vld [vmem:[%s0] sm:$0xff]
  %v15 = vld [vmem:[%s1] sm:$0xff]
  %v16 = vld [vmem:[%s1 + $0x8] sm:$0xff]
  %v17 = vld [vmem:[%s1 + $0x10] sm:$0xff]
  %v18 = vld [vmem:[%s1 + $0x18] sm:$0xff]
  %v19 = vld [vmem:[%s1 + $0x20] sm:$0xff]
  %v20 = vld [vmem:[%s1 + $0x28] sm:$0xff]
  %v21 = vld [vmem:[%s1 + $0x30] sm:$0xff]
  %v22 = vld [vmem:[%s1 + $0x38] sm:$0xff]
  %v23 = vld [vmem:[%s1 + $0x40] sm:$0xff]
  %v24 = vld [vmem:[%s1 + $0x48] sm:$0xff]
  %v25 = vld [vmem:[%s1 + $0x50] sm:$0xff]
  %v26 = vld [vmem:[%s1 + $0x58] sm:$0xff]
  %v27 = vld [vmem:[%s1 + $0x60] sm:$0xff]
  %v28 = vld [vmem:[%s1 + $0x68] sm:$0xff]
  %v29 = vld [vmem:[%s1 + $0x70] sm:$0xff]
  %v30 = vld [vmem:[%s1 + $0x78] sm:$0xff]
  %v31 = vld [vmem:[%s1 + $0x80] sm:$0xff]
  %v32 = vld [vmem:[%s1 + $0x88] sm:$0xff]
  %v33 = vld [vmem:[%s1 + $0x90] sm:$0xff]
  %v34 = vld [vmem:[%s1 + $0x98] sm:$0xff]
  %v35 = vld [vmem:[%s1 + $0xa0] sm:$0xff]
  %v36 = vld [vmem:[%s1 + $0xa8] sm:$0xff]
  %v37 = vld [vmem:[%s1 + $0xb0] sm:$0xff]
  %v38 = vld [vmem:[%s1 + $0xb8] sm:$0xff]
  %v39 = vld [vmem:[%s1 + $0xc0] sm:$0xff]
  %v40 = vld [vmem:[%s1 + $0xc8] sm:$0xff]
  %v41 = vld [vmem:[%s1 + $0xd0] sm:$0xff]
  %v42 = vld [vmem:[%s1 + $0xd8] sm:$0xff]
  %v43 = vld [vmem:[%s1 + $0xe0] sm:$0xff]
  %v44 = vld [vmem:[%s1 + $0xe8] sm:$0xff]
  %v45 = vld [vmem:[%s1 + $0xf0] sm:$0xff]
  %v46 = vld [vmem:[%s1 + $0xf8] sm:$0xff]
  %v47 = vld [vmem:[%s1 + $0x100] sm:$0xff]
  %v48 = vld [vmem:[%s1 + $0x108] sm:$0xff]
  %v49 = vld [vmem:[%s1 + $0x110] sm:$0xff]
  %v50 = vld [vmem:[%s1 + $0x118] sm:$0xff]
  %v51 = vld [vmem:[%s1 + $0x120] sm:$0xff]
  %v52 = vld [vmem:[%s1 + $0x128] sm:$0xff]
  %v53 = vld [vmem:[%s1 + $0x130] sm:$0xff]
  %v54 = vld [vmem:[%s1 + $0x138] sm:$0xff]
  %v55 = vld [vmem:[%s1 + $0x140] sm:$0xff]
  %v56 = vld [vmem:[%s1 + $0x148] sm:$0xff]
  %v57 = vld [vmem:[%s1 + $0x150] sm:$0xff]
  %v58 = vld [vmem:[%s1 + $0x158] sm:$0xff]
  %v59 = vld [vmem:[%s1 + $0x160] sm:$0xff]
  %v60 = vld [vmem:[%s1 + $0x168] sm:$0xff]
  %v61 = vld [vmem:[%s1 + $0x170] sm:$0xff]
  %v62 = vld [vmem:[%s1 + $0x178] sm:$0xff]
  %v63 = vld [vmem:[%s2] sm:$0xff]
  %65 = vset.pattern.permute.xlu0 0
  %66 = vperm.xlu0 %65, %v63
  %v67 = vpop.permute.xlu0 %66
  %69 = vmatpush.msra.mxu0 %v60
  %70 = vmatpush.msra.mxu0 %v57
  %71 = vmatpush.msra.mxu0 %v54
  %72 = vmatpush.msra.mxu0 %v51
  %73 = vmatpush.msra.mxu0 %v48
  %74 = vmatpush.msra.mxu0 %v45
  %75 = vmatpush.msra.mxu0 %v42
  %76 = vmatpush.msra.mxu0 %v39
  %77 = vmatpush.msra.mxu0 %v36
  %78 = vmatpush.msra.mxu0 %v33
  %79 = vmatpush.msra.mxu0 %v30
  %80 = vmatpush.msra.mxu0 %v27
  %81 = vmatpush.msra.mxu0 %v24
  %82 = vmatpush.msra.mxu0 %v21
  %83 = vmatpush.msra.mxu0 %v18
  %84 = vmatpush.msra.mxu0 %v15
  %85 = vmatmul.f32.gmra.mxu0 %v14
  %v86 = vpop.f32.mrf.mxu0
  %v87 = vadd.f32 %v67, %v86
  %88 = vdwg.mxu0
  %89 = vmatpush.msra.mxu0 %v61
  %90 = vmatpush.msra.mxu0 %v58
  %91 = vmatpush.msra.mxu0 %v55
  %92 = vmatpush.msra.mxu0 %v52
  %93 = vmatpush.msra.mxu0 %v49
  %94 = vmatpush.msra.mxu0 %v46
  %95 = vmatpush.msra.mxu0 %v43
  %96 = vmatpush.msra.mxu0 %v40
  %97 = vmatpush.msra.mxu0 %v37
  %98 = vmatpush.msra.mxu0 %v34
  %99 = vmatpush.msra.mxu0 %v31
  %100 = vmatpush.msra.mxu0 %v28
  %101 = vmatpush.msra.mxu0 %v25
  %102 = vmatpush.msra.mxu0 %v22
  %103 = vmatpush.msra.mxu0 %v19
  %104 = vmatpush.msra.mxu0 %v16
  %105 = vmatmul.f32.gmra.mxu0 %v14
  %v106 = vpop.f32.mrf.mxu0
  %v107 = vadd.f32 %v67, %v106
  %108 = vdwg.mxu0
  %109 = vmatpush.msra.mxu0 %v62
  %110 = vmatpush.msra.mxu0 %v59
  %111 = vmatpush.msra.mxu0 %v56
  %112 = vmatpush.msra.mxu0 %v53
  %113 = vmatpush.msra.mxu0 %v50
  %114 = vmatpush.msra.mxu0 %v47
  %115 = vmatpush.msra.mxu0 %v44
  %116 = vmatpush.msra.mxu0 %v41
  %117 = vmatpush.msra.mxu0 %v38
  %118 = vmatpush.msra.mxu0 %v35
  %119 = vmatpush.msra.mxu0 %v32
  %120 = vmatpush.msra.mxu0 %v29
  %121 = vmatpush.msra.mxu0 %v26
  %122 = vmatpush.msra.mxu0 %v23
  %123 = vmatpush.msra.mxu0 %v20
  %124 = vmatpush.msra.mxu0 %v17
  %125 = vmatmul.f32.gmra.mxu0 %v14
  %v126 = vpop.f32.mrf.mxu0
  %v127 = vadd.f32 %v67, %v126
  %128 = vdwg.mxu0
  %129 = vst [vmem:[%s3] sm:$0xff] %v87
  %130 = vst [vmem:[%s3 + $0x8] sm:$0xff] %v107
  %131 = vst [vmem:[%s3 + $0x10] sm:$0xff] %v127
  // Predicated region
  $region14: #{net_forward.1} parent=0 // pred_check
    _
  $region15: #{net_forward.1} parent=0 // pred_check_branch
    %133 = sbr.rel (0) target = $region17
  $region16: #{net_forward.1} parent=0 // pred_region
    _
  $region17: #{net_forward.1} parent=0 // pred_fallthru
    _
  // Predicated region
  $region18: #{net_forward.1} parent=0 // pred_check
    _
  $region19: #{net_forward.1} parent=0 // pred_check_branch
    %135 = sbr.rel (0) target = $region21
  $region20: #{net_forward.1} parent=0 // pred_region
    _
  $region21: #{net_forward.1} parent=0 // pred_fallthru
    _

</llo_original>
